<compile_context>
chip_gen: v7x
topology: tpu7x:2x2x1
jax: 0.10.0
libtpu: 0.0.40
codegen_flags: <defaults>
</compile_context>

<pallas_src>
import jax
import jax.numpy as jnp
from jax.experimental import pallas as pl
from jax.experimental.pallas import tpu as pltpu

_LANES = 128      # vreg lane width; last dim of the slab is exactly one lane row
_SUBLANES = 8     # vreg sublane count; keep slab rows a multiple of this


def _bilinear_square_kernel(w_ref, b_ref, x_ref, o_ref):
    # w_ref, b_ref: (1,) scalars in SMEM
    # x_ref, o_ref: (tile_rows, 128) lane-dense tiles in VMEM
    w = w_ref[0]
    b = b_ref[0]
    x = x_ref[...]
    # Bilinear(1,1,1) with identical left/right inputs: y = x * W * x + b
    o_ref[...] = x * x * w + b


def neural_network_forward(x, weight, bias, *, tile_rows=1024):
    """Equivalent of NeuralNetwork.forward.

    x      : (N, C, H, W) float32 with C*H*W == 1 (required by Bilinear(1,1,1))
    weight : (1, 1, 1) float32   (torch nn.Bilinear weight, shape (out, in1, in2))
    bias   : (1,) float32
    returns: (N, 1) float32
    """
    n = x.shape[0]
    # nn.Flatten: collapse all non-batch dims (layout plumbing, stays in JAX).
    x_flat = x.reshape(n, -1).astype(jnp.float32)
    assert x_flat.shape[1] == 1, "Bilinear(1,1,1) requires a single flattened feature"

    # ---- lane-dense repack: (N,) -> (rows_padded, 128), zero-padded tail ----
    rows = pl.cdiv(n, _LANES)
    rows8 = _SUBLANES * pl.cdiv(rows, _SUBLANES)          # sublane-aligned row count
    tile_r = min(tile_rows, rows8)                        # full array when small, else 1024 rows
    rows_padded = tile_r * pl.cdiv(rows8, tile_r)
    total = rows_padded * _LANES

    flat = x_flat.reshape(-1)
    if total != n:                                        # skip the pad copy when already exact
        flat = jnp.pad(flat, (0, total - n))
    x_slab = flat.reshape(rows_padded, _LANES)

    w_smem = weight.reshape(1).astype(jnp.float32)
    b_smem = bias.reshape(1).astype(jnp.float32)

    grid = (rows_padded // tile_r,)
    out_slab = pl.pallas_call(
        _bilinear_square_kernel,
        out_shape=jax.ShapeDtypeStruct((rows_padded, _LANES), jnp.float32),
        grid=grid,
        in_specs=[
            pl.BlockSpec(memory_space=pltpu.SMEM),             # weight scalar
            pl.BlockSpec(memory_space=pltpu.SMEM),             # bias scalar
            pl.BlockSpec((tile_r, _LANES), lambda i: (i, 0)),  # x slab tile
        ],
        out_specs=pl.BlockSpec((tile_r, _LANES), lambda i: (i, 0)),
        # Reuse x's HBM slab for the output (identical shape/dtype).
        input_output_aliases={2: 0},
        compiler_params=pltpu.CompilerParams(
            dimension_semantics=("parallel",),  # shard batch tiles across TCs on v7x
        ),
    )(w_smem, b_smem, x_slab)

    # Drop padded rows (they only contain the bias) and restore (N, 1).
    return out_slab.reshape(-1)[:n].reshape(n, 1)


if __name__ == "__main__":
    key = jax.random.PRNGKey(0)
    k_x, k_w, k_b, k_x2 = jax.random.split(key, 4)

    # Deterministic parameter init (PyTorch default: U(-1/sqrt(in1), 1/sqrt(in1)) = U(-1, 1)).
    weight = jax.random.uniform(k_w, (1, 1, 1), minval=-1.0, maxval=1.0, dtype=jnp.float32)
    bias = jax.random.uniform(k_b, (1,), minval=-1.0, maxval=1.0, dtype=jnp.float32)

    # Small input consistent with the module: Flatten must yield exactly 1 feature.
    batch = 8
    x = jax.random.normal(k_x, (batch, 1, 1, 1), dtype=jnp.float32)

    pred = jax.block_until_ready(neural_network_forward(x, weight, bias))

    # Pure-JAX reference check.
    x_col = x.reshape(batch, 1)
    ref = x_col * x_col * weight[0, 0, 0] + bias[0]
    assert pred.shape == (batch, 1)
    assert jnp.allclose(pred, ref, atol=1e-6), "mismatch vs reference (batch=8)"

    # Second check exercising multi-row packing + padding slice-off.
    batch2 = 300
    x2 = jax.random.normal(k_x2, (batch2, 1, 1, 1), dtype=jnp.float32)
    pred2 = jax.block_until_ready(neural_network_forward(x2, weight, bias))
    x2_col = x2.reshape(batch2, 1)
    ref2 = x2_col * x2_col * weight[0, 0, 0] + bias[0]
    assert pred2.shape == (batch2, 1)
    assert jnp.allclose(pred2, ref2, atol=1e-6), "mismatch vs reference (batch=300)"

    print("KERNEL_OK")
</pallas_src>

<mosaic_0001>
module attributes {stable_mosaic.version = 11 : i64} {
  func.func @_bilinear_square_kernel(%arg0: i32, %arg1: memref<1xf32, #tpu.memory_space<smem>>, %arg2: memref<1xf32, #tpu.memory_space<smem>>, %arg3: memref<8x128xf32, #tpu.memory_space<vmem>>, %arg4: memref<8x128xf32, #tpu.memory_space<vmem>>) attributes {dimension_semantics = [#tpu.dimension_semantics<parallel>], iteration_bounds = array<i64: 1>, scalar_prefetch = 0 : i64, scratch_operands = 0 : i64, tpu.core_type = #tpu.core_type<tc>, window_params = [{transform_indices = @transform_0, window_bounds = array<i64: 1>}, {transform_indices = @transform_1, window_bounds = array<i64: 1>}, {transform_indices = @transform_2, window_bounds = array<i64: 8, 128>}, {transform_indices = @transform_3, window_bounds = array<i64: 8, 128>}]} {
    %c0 = arith.constant 0 : index
    %0 = memref.load %arg1[%c0] : memref<1xf32, #tpu.memory_space<smem>>
    %c0_0 = arith.constant 0 : index
    %1 = memref.load %arg2[%c0_0] : memref<1xf32, #tpu.memory_space<smem>>
    %c0_1 = arith.constant 0 : index
    %c0_2 = arith.constant 0 : index
    %2 = vector.load %arg3[%c0_1, %c0_2] : memref<8x128xf32, #tpu.memory_space<vmem>>, vector<8x128xf32>
    %3 = arith.mulf %2, %2 : vector<8x128xf32>
    %4 = vector.broadcast %0 : f32 to vector<8x128xf32>
    %5 = arith.mulf %3, %4 : vector<8x128xf32>
    %6 = vector.broadcast %1 : f32 to vector<8x128xf32>
    %7 = arith.addf %5, %6 : vector<8x128xf32>
    %c0_3 = arith.constant 0 : index
    %c0_4 = arith.constant 0 : index
    %8 = vector.load %arg4[%c0_3, %c0_4] : memref<8x128xf32, #tpu.memory_space<vmem>>, vector<8x128xf32>
    tpu.vector_store %arg4[%c0_3, %c0_4], %7 {strides = array<i32>} : memref<8x128xf32, #tpu.memory_space<vmem>>, vector<8x128xf32>,
    return
  }
  func.func @transform_0(%arg0: i32) -> i32 {
    %c0_i32 = arith.constant 0 : i32
    %c0_i32_0 = arith.constant 0 : i32
    return %c0_i32 : i32
  }
  func.func @transform_1(%arg0: i32) -> i32 {
    %c0_i32 = arith.constant 0 : i32
    %c0_i32_0 = arith.constant 0 : i32
    return %c0_i32 : i32
  }
  func.func @transform_2(%arg0: i32) -> (i32, i32) {
    %c0_i32 = arith.constant 0 : i32
    %c0_i32_0 = arith.constant 0 : i32
    return %arg0, %c0_i32 : i32, i32
  }
  func.func @transform_3(%arg0: i32) -> (i32, i32) {
    %c0_i32 = arith.constant 0 : i32
    %c0_i32_0 = arith.constant 0 : i32
    return %arg0, %c0_i32 : i32, i32
  }
}

</mosaic_0001>

<llo_original>
// kernel: tpu_custom_call.1
$region0: #{tpu_custom_call.1}
  #allocation0 [shape = 'u32[]', space=smem, size = 0x4, offset = 0x4, fixed_abs, tag = 'smem constant byte address 0x4 - core index']
  #allocation1 [shape = 'u32[144,128]{1,0:T(1,128)}', space=vmem, size = 0x12000, scoped, tag = 'internal scratch']
  #allocation2 [shape = 'f32[1]{0:T(128)S(6)}', space=smem, size = 0x200, scoped, tag = 'scoped memory for tpu_custom_call.1']
  #allocation3 [shape = 'f32[1]{0:T(128)S(6)}', space=smem, size = 0x200, scoped, tag = 'scoped memory for tpu_custom_call.1']
  %s0 = inlined_call_operand.<no memory space> [shape: f32[1], index: 0, kind: input, shape index: {}]
  %s1 = inlined_call_operand.<no memory space> [shape: f32[1], index: 1, kind: input, shape index: {}]
  %s2 = inlined_call_operand.hbm [shape: f32[8,128], index: 2, kind: input, shape index: {}, may-alias: {2,3}]
  %s3 = inlined_call_operand.hbm [shape: f32[8,128], index: 3, kind: output, shape index: {}, may-alias: {2,3}]
  %s4 = sld [smem:[#allocation0]]
  $region26: #{tpu_custom_call.1} parent=0
    _
  %s6 = ssub.s32 1, %s4
  %s7 = scalar_select 0, %s6, %s4
  %8 = sst [smem:[#allocation2]] %s0
  %9 = sst [smem:[#allocation3]] %s1
  $region1: #{tpu_custom_call.1} parent=0
    #allocation4 [shape = 'u8[4096]{0}', space=vmem, size = 0x1000, scoped, tag = 'input window, operand 2, single buffered']
    #allocation5 [shape = 's32[1]{0}', space=sflag, size = 0x4, scoped, tag = 'scoped memory for tpu_custom_call.1']
    #allocation6 [shape = 's32[1]{0}', space=sflag, size = 0x4, scoped, tag = 'scoped memory for tpu_custom_call.1']
    #allocation7 [shape = 'u8[4096]{0}', space=vmem, size = 0x1000, scoped, tag = 'output window, operand 0, single buffered']
    %10 = vsyncpa [#allocation5], 0
    %11 = vsyncpa [#allocation6], 0
    // Predicated region
    $region2: #{tpu_custom_call.1} parent=1 // pred_check
      _
    $region3: #{tpu_custom_call.1} parent=1 // pred_check_branch
      %13 = sbr.rel (0) target = $region5
    $region4: #{tpu_custom_call.1} parent=1 // pred_region
      _
    $region5: #{tpu_custom_call.1} parent=1 // pred_fallthru
      _
    // Predicated region
    $region6: #{tpu_custom_call.1} parent=1 // pred_check
      _
    $region7: #{tpu_custom_call.1} parent=1 // pred_check_branch
      %15 = sbr.rel (0) target = $region9
    $region8: #{tpu_custom_call.1} parent=1 // pred_region
      _
    $region9: #{tpu_custom_call.1} parent=1 // pred_fallthru
      _
    // Predicated region
    $region10: #{tpu_custom_call.1} parent=1 // pred_check
      _
    $region11: #{tpu_custom_call.1} parent=1 // pred_check_branch
      %17 = sbr.rel (0) target = $region13
    $region12: #{tpu_custom_call.1} parent=1 // pred_region
      %s19 = ssub.s32 128, 128
      %20 = vsyncadd [#allocation5], %s19
      %s22 = sshll.u32 [#allocation4], 4
      %s23 = int_to_ptr.vmem [resolvable:$true] %s22
      %25 = dma.hbm_to_vmem [thread:$0]  %s2, 128, %s23, [#allocation5]
    $region13: #{tpu_custom_call.1} parent=1 // pred_fallthru
      _
    // Predicated region
    $region14: #{tpu_custom_call.1} parent=1 // pred_check
      _
    $region15: #{tpu_custom_call.1} parent=1 // pred_check_branch
      %27 = sbr.rel (0) target = $region17
    $region16: #{tpu_custom_call.1} parent=1 // pred_region
      %28 = dma.done [#allocation5], 128
    $region17: #{tpu_custom_call.1} parent=1 // pred_fallthru
      _
    %s29 = sld [smem:[#allocation2]]
    %s30 = sld [smem:[#allocation3]]
    %v31 = vld [vmem:[#allocation4] sm:$0xff]
    %v32 = vmul.f32 %v31, %v31
    %v33 = vstv %s29
    %v34 = vmul.f32 %v32, %v33
    %v35 = vstv %s30
    %v36 = vadd.f32 %v34, %v35
    %37 = vst [vmem:[#allocation7] sm:$0xff] %v36
    // Predicated region
    $region18: #{tpu_custom_call.1} parent=1 // pred_check
      _
    $region19: #{tpu_custom_call.1} parent=1 // pred_check_branch
      %39 = sbr.rel (0) target = $region21
    $region20: #{tpu_custom_call.1} parent=1 // pred_region
      %s41 = ssub.s32 128, 128
      %42 = vsyncadd [#allocation6], %s41
      %s44 = sshll.u32 [#allocation7], 4
      %s45 = int_to_ptr.vmem [resolvable:$true] %s44
      %47 = dma.vmem_to_hbm [thread:$0]  %s45, 128, %s3, [#allocation6]
    $region21: #{tpu_custom_call.1} parent=1 // pred_fallthru
      _
    // Predicated region
    $region22: #{tpu_custom_call.1} parent=1 // pred_check
      _
    $region23: #{tpu_custom_call.1} parent=1 // pred_check_branch
      %49 = sbr.rel (0) target = $region25
    $region24: #{tpu_custom_call.1} parent=1 // pred_region
      %50 = dma.done [#allocation6], 128
    $region25: #{tpu_custom_call.1} parent=1 // pred_fallthru
      _
    %51 = vsyncpa [#allocation5], 1
    %52 = vsyncpa [#allocation6], 1

</llo_original>
